<compile_context>
chip_gen: v5e
topology: v5e:2x2
jax: 0.10.0
libtpu: 0.0.40
codegen_flags: <defaults>
</compile_context>

<pallas_src>
import jax
import jax.numpy as jnp
import numpy as np
from jax.experimental import pallas as pl
from jax.experimental.pallas import tpu as pltpu

IN_FEATURES = 17
H1 = 32
H2 = 32
OUT_FEATURES = 7
OUT_PAD = 8            # class axis padded 7 -> 8 (kept full-dim in the BlockSpec)
EPS = 1e-5
MAX_TB = 2048          # batch rows per grid step (safe on v5e/v6e/v7x w/ 32 MiB VMEM)


def _round_up(n, m):
    return ((n + m - 1) // m) * m


# ---------------------------------------------------------------------------
# Kernel: fused (L1·BN1·L2·BN2) matmul, ReLU, fused (L3·BN3) matmul, ReLU,
# masked log-softmax over the 7 real classes.
# ---------------------------------------------------------------------------
def classifier_kernel(x_ref, w12_ref, b12_ref, w3_ref, b3_ref, o_ref):
    # Cast at the consumer: callers may stream x as bf16 from HBM.
    x = x_ref[...].astype(jnp.float32)                              # (TB, 17)

    # layer_1 -> BN1 -> (dropout) -> layer_2 -> BN2, folded into one matmul
    h2 = jnp.dot(x, w12_ref[...], preferred_element_type=jnp.float32) + b12_ref[...]
    h2 = jnp.maximum(h2, 0.0)                                       # ReLU  (TB, 32)

    # layer_3 -> BN3, folded into one matmul, then ReLU
    h3 = jnp.dot(h2, w3_ref[...], preferred_element_type=jnp.float32) + b3_ref[...]
    h3 = jnp.maximum(h3, 0.0)                                       # (TB, 8)

    # log-softmax over dim=1; mask the single padded class column
    col = jax.lax.broadcasted_iota(jnp.int32, h3.shape, 1)
    valid = col < OUT_FEATURES
    neg = jnp.finfo(h3.dtype).min
    z = jnp.where(valid, h3, jnp.full_like(h3, neg))
    m = jnp.max(z, axis=1, keepdims=True)
    e = jnp.where(valid, jnp.exp(z - m), 0.0)
    s = jnp.sum(e, axis=1, keepdims=True)
    o_ref[...] = (jnp.where(valid, z - m - jnp.log(s), 0.0)).astype(o_ref.dtype)


def classifier_forward(x, folded):
    """x: (N, IN_FEATURES) float32 (or bfloat16). Returns (N, OUT_FEATURES) log-probs."""
    w12, b12, w3, b3 = folded
    n = x.shape[0]

    # Big tiles (overhead amortization) but >= 2 grid steps when possible so
    # the parallel grid axis shards across v7x's 2 TensorCores.
    tb = max(8, min(MAX_TB, _round_up(pl.cdiv(n, 2), 8)))
    grid = (pl.cdiv(n, tb),)   # ragged last block: no wrapper-side zero-pad copy

    const = lambda a: pl.BlockSpec(a.shape, lambda i: (0, 0))

    out = pl.pallas_call(
        classifier_kernel,
        out_shape=jax.ShapeDtypeStruct((n, OUT_PAD), jnp.float32),
        grid=grid,
        in_specs=[
            pl.BlockSpec((tb, IN_FEATURES), lambda i: (i, 0)),      # lane-tight input
            const(w12), const(b12), const(w3), const(b3),
        ],
        out_specs=pl.BlockSpec((tb, OUT_PAD), lambda i: (i, 0)),    # narrow output
        compiler_params=pltpu.CompilerParams(
            dimension_semantics=("parallel",),
            vmem_limit_bytes=32 << 20),
    )(x, w12, b12, w3, b3)

    return out[:n, :OUT_FEATURES]


# ---------------------------------------------------------------------------
# Host-side parameter folding (eval-mode BN -> affine, composed into Linears).
# ---------------------------------------------------------------------------
def fold_params(r):
    f32 = jnp.float32
    # BN1 folded into layer_1:  h1 = x @ A1^T + c1
    s1 = r["g1"] / jnp.sqrt(r["v1"] + EPS)
    a1 = r["w1"] * s1[:, None]                       # (32, 17)
    c1 = (r["b1"] - r["m1"]) * s1 + r["be1"]         # (32,)

    # layer_2 composed on top (no nonlinearity between), then BN2 folded in
    m12 = a1.T @ r["w2"].T                           # (17, 32)
    d12 = r["w2"] @ c1 + r["b2"]                     # (32,)
    s2 = r["g2"] / jnp.sqrt(r["v2"] + EPS)
    w12 = (m12 * s2[None, :]).astype(f32)            # (17, 32)
    b12 = ((d12 - r["m2"]) * s2 + r["be2"]).astype(f32)

    # BN3 folded into layer_3, class axis zero-padded 7 -> 8
    s3 = r["g3"] / jnp.sqrt(r["v3"] + EPS)
    w3f = r["w3"].T * s3[None, :]                    # (32, 7)
    b3f = (r["b3"] - r["m3"]) * s3 + r["be3"]        # (7,)
    w3p = jnp.zeros((H2, OUT_PAD), f32).at[:, :OUT_FEATURES].set(w3f)
    b3p = jnp.zeros((OUT_PAD,), f32).at[:OUT_FEATURES].set(b3f)

    return (w12, b12.reshape(1, H2), w3p, b3p.reshape(1, OUT_PAD))


def init_params(key):
    ks = jax.random.split(key, 15)

    def lin(kw, kb, fan_in, fan_out):
        bound = 1.0 / np.sqrt(fan_in)
        w = jax.random.uniform(kw, (fan_out, fan_in), jnp.float32, -bound, bound)
        b = jax.random.uniform(kb, (fan_out,), jnp.float32, -bound, bound)
        return w, b

    def bn(kg, kb, km, n):
        gamma = 1.0 + 0.1 * jax.random.normal(kg, (n,), jnp.float32)
        beta = 0.1 * jax.random.normal(kb, (n,), jnp.float32)
        mean = 0.1 * jax.random.normal(km, (n,), jnp.float32)
        var = jnp.linspace(0.5, 1.5, n, dtype=jnp.float32)
        return gamma, beta, mean, var

    w1, b1 = lin(ks[0], ks[1], IN_FEATURES, H1)
    w2, b2 = lin(ks[2], ks[3], H1, H2)
    w3, b3 = lin(ks[4], ks[5], H2, OUT_FEATURES)
    g1, be1, m1, v1 = bn(ks[6], ks[7], ks[8], H1)
    g2, be2, m2, v2 = bn(ks[9], ks[10], ks[11], H2)
    g3, be3, m3, v3 = bn(ks[12], ks[13], ks[14], OUT_FEATURES)

    raw = dict(w1=w1, b1=b1, g1=g1, be1=be1, m1=m1, v1=v1,
               w2=w2, b2=b2, g2=g2, be2=be2, m2=m2, v2=v2,
               w3=w3, b3=b3, g3=g3, be3=be3, m3=m3, v3=v3)
    return raw, fold_params(raw)


def reference_forward(x, r):
    """Unfused, layer-by-layer reference matching the torch eval forward."""
    def bn(z, g, b, m, v):
        return (z - m) * g / jnp.sqrt(v + EPS) + b
    h1 = bn(x @ r["w1"].T + r["b1"], r["g1"], r["be1"], r["m1"], r["v1"])
    h2 = jnp.maximum(bn(h1 @ r["w2"].T + r["b2"], r["g2"], r["be2"], r["m2"], r["v2"]), 0.0)
    h3 = jnp.maximum(bn(h2 @ r["w3"].T + r["b3"], r["g3"], r["be3"], r["m3"], r["v3"]), 0.0)
    return jax.nn.log_softmax(h3, axis=1)


if __name__ == "__main__":
    key = jax.random.PRNGKey(0)
    kx, kp = jax.random.split(key)

    batch = 300                      # 2 ragged grid steps (exercises OOB masking path)
    x = jax.random.normal(kx, (batch, IN_FEATURES), jnp.float32)

    raw, folded = init_params(kp)

    out = classifier_forward(x, folded)
    out = jax.block_until_ready(out)

    ref = reference_forward(x, raw)
    np.testing.assert_allclose(np.asarray(out), np.asarray(ref), atol=1e-4, rtol=1e-4)

    print("KERNEL_OK")
</pallas_src>

<mosaic_0001>
module attributes {stable_mosaic.version = 11 : i64} {
  func.func @classifier_kernel(%arg0: i32, %arg1: memref<152x17xf32, #tpu.memory_space<vmem>>, %arg2: memref<17x32xf32, #tpu.memory_space<vmem>>, %arg3: memref<1x32xf32, #tpu.memory_space<vmem>>, %arg4: memref<32x8xf32, #tpu.memory_space<vmem>>, %arg5: memref<1x8xf32, #tpu.memory_space<vmem>>, %arg6: memref<152x8xf32, #tpu.memory_space<vmem>>) attributes {dimension_semantics = [#tpu.dimension_semantics<parallel>], iteration_bounds = array<i64: 2>, scalar_prefetch = 0 : i64, scratch_operands = 0 : i64, tpu.core_type = #tpu.core_type<tc>, window_params = [{transform_indices = @transform_0, window_bounds = array<i64: 152, 17>}, {pipeline_mode = #tpu.pipeline_mode<synchronous>, transform_indices = @transform_1, window_bounds = array<i64: 17, 32>}, {pipeline_mode = #tpu.pipeline_mode<synchronous>, transform_indices = @transform_2, window_bounds = array<i64: 1, 32>}, {pipeline_mode = #tpu.pipeline_mode<synchronous>, transform_indices = @transform_3, window_bounds = array<i64: 32, 8>}, {pipeline_mode = #tpu.pipeline_mode<synchronous>, transform_indices = @transform_4, window_bounds = array<i64: 1, 8>}, {transform_indices = @transform_5, window_bounds = array<i64: 152, 8>}]} {
    %c0 = arith.constant 0 : index
    %c0_0 = arith.constant 0 : index
    %0 = vector.load %arg1[%c0, %c0_0] : memref<152x17xf32, #tpu.memory_space<vmem>>, vector<152x17xf32>
    %c0_1 = arith.constant 0 : index
    %c0_2 = arith.constant 0 : index
    %1 = vector.load %arg2[%c0_1, %c0_2] : memref<17x32xf32, #tpu.memory_space<vmem>>, vector<17x32xf32>
    %cst = arith.constant dense<0.000000e+00> : vector<152x32xf32>
    %2 = tpu.matmul %0, %1, %cst {dimension_numbers = #tpu.dot_dimension_numbers<[1], [0], [0], [1], [0, 0, 1, 1], [], []>} : vector<152x17xf32>, vector<17x32xf32>, vector<152x32xf32> -> vector<152x32xf32>
    %c0_3 = arith.constant 0 : index
    %c0_4 = arith.constant 0 : index
    %3 = vector.load %arg3[%c0_3, %c0_4] : memref<1x32xf32, #tpu.memory_space<vmem>>, vector<1x32xf32>
    %4 = vector.broadcast %3 : vector<1x32xf32> to vector<152x32xf32>
    %5 = arith.addf %2, %4 : vector<152x32xf32>
    %cst_5 = arith.constant 0.000000e+00 : f32
    %6 = vector.broadcast %cst_5 : f32 to vector<152x32xf32>
    %7 = arith.maximumf %5, %6 : vector<152x32xf32>
    %c0_6 = arith.constant 0 : index
    %c0_7 = arith.constant 0 : index
    %8 = vector.load %arg4[%c0_6, %c0_7] : memref<32x8xf32, #tpu.memory_space<vmem>>, vector<32x8xf32>
    %cst_8 = arith.constant dense<0.000000e+00> : vector<152x8xf32>
    %9 = tpu.matmul %7, %8, %cst_8 {dimension_numbers = #tpu.dot_dimension_numbers<[1], [0], [0], [1], [0, 0, 1, 1], [], []>} : vector<152x32xf32>, vector<32x8xf32>, vector<152x8xf32> -> vector<152x8xf32>
    %c0_9 = arith.constant 0 : index
    %c0_10 = arith.constant 0 : index
    %10 = vector.load %arg5[%c0_9, %c0_10] : memref<1x8xf32, #tpu.memory_space<vmem>>, vector<1x8xf32>
    %11 = vector.broadcast %10 : vector<1x8xf32> to vector<152x8xf32>
    %12 = arith.addf %9, %11 : vector<152x8xf32>
    %cst_11 = arith.constant 0.000000e+00 : f32
    %13 = vector.broadcast %cst_11 : f32 to vector<152x8xf32>
    %14 = arith.maximumf %12, %13 : vector<152x8xf32>
    %15 = tpu.iota {dimensions = array<i32: 1>} : vector<152x8xi32>
    %c7_i32 = arith.constant 7 : i32
    %16 = vector.broadcast %c7_i32 : i32 to vector<152x8xi32>
    %17 = arith.cmpi slt, %15, %16 : vector<152x8xi32>
    %cst_12 = arith.constant -3.40282347E+38 : f32
    %18 = vector.broadcast %cst_12 : f32 to vector<152x8xf32>
    %19 = arith.select %17, %14, %18 : vector<152x8xi1>, vector<152x8xf32>
    %cst_13 = arith.constant dense<0xFF800000> : vector<152xf32>
    %20 = vector.multi_reduction <maximumf>, %19, %cst_13 [1] : vector<152x8xf32> to vector<152xf32>
    %21 = vector.shape_cast %20 : vector<152xf32> to vector<152x1xf32>
    %22 = vector.broadcast %21 : vector<152x1xf32> to vector<152x8xf32>
    %23 = arith.subf %19, %22 : vector<152x8xf32>
    %24 = math.exp %23 : vector<152x8xf32>
    %cst_14 = arith.constant 0.000000e+00 : f32
    %25 = vector.broadcast %cst_14 : f32 to vector<152x8xf32>
    %26 = arith.select %17, %24, %25 : vector<152x8xi1>, vector<152x8xf32>
    %cst_15 = arith.constant dense<0.000000e+00> : vector<152xf32>
    %27 = vector.multi_reduction <add>, %26, %cst_15 [1] : vector<152x8xf32> to vector<152xf32>
    %28 = vector.shape_cast %27 : vector<152xf32> to vector<152x1xf32>
    %29 = vector.broadcast %21 : vector<152x1xf32> to vector<152x8xf32>
    %30 = arith.subf %19, %29 : vector<152x8xf32>
    %31 = math.log %28 : vector<152x1xf32>
    %32 = vector.broadcast %31 : vector<152x1xf32> to vector<152x8xf32>
    %33 = arith.subf %30, %32 : vector<152x8xf32>
    %cst_16 = arith.constant 0.000000e+00 : f32
    %34 = vector.broadcast %cst_16 : f32 to vector<152x8xf32>
    %35 = arith.select %17, %33, %34 : vector<152x8xi1>, vector<152x8xf32>
    %c0_17 = arith.constant 0 : index
    %c0_18 = arith.constant 0 : index
    %36 = vector.load %arg6[%c0_17, %c0_18] : memref<152x8xf32, #tpu.memory_space<vmem>>, vector<152x8xf32>
    tpu.vector_store %arg6[%c0_17, %c0_18], %35 {strides = array<i32>} : memref<152x8xf32, #tpu.memory_space<vmem>>, vector<152x8xf32>,
    return
  }
  func.func @transform_0(%arg0: i32) -> (i32, i32) {
    %c0_i32 = arith.constant 0 : i32
    %c0_i32_0 = arith.constant 0 : i32
    return %arg0, %c0_i32 : i32, i32
  }
  func.func @transform_1(%arg0: i32) -> (i32, i32) {
    %c0_i32 = arith.constant 0 : i32
    %c0_i32_0 = arith.constant 0 : i32
    %c0_i32_1 = arith.constant 0 : i32
    return %c0_i32, %c0_i32_0 : i32, i32
  }
  func.func @transform_2(%arg0: i32) -> (i32, i32) {
    %c0_i32 = arith.constant 0 : i32
    %c0_i32_0 = arith.constant 0 : i32
    %c0_i32_1 = arith.constant 0 : i32
    return %c0_i32, %c0_i32_0 : i32, i32
  }
  func.func @transform_3(%arg0: i32) -> (i32, i32) {
    %c0_i32 = arith.constant 0 : i32
    %c0_i32_0 = arith.constant 0 : i32
    %c0_i32_1 = arith.constant 0 : i32
    return %c0_i32, %c0_i32_0 : i32, i32
  }
  func.func @transform_4(%arg0: i32) -> (i32, i32) {
    %c0_i32 = arith.constant 0 : i32
    %c0_i32_0 = arith.constant 0 : i32
    %c0_i32_1 = arith.constant 0 : i32
    return %c0_i32, %c0_i32_0 : i32, i32
  }
  func.func @transform_5(%arg0: i32) -> (i32, i32) {
    %c0_i32 = arith.constant 0 : i32
    %c0_i32_0 = arith.constant 0 : i32
    return %arg0, %c0_i32 : i32, i32
  }
}

</mosaic_0001>

<llo_original>
// kernel: tpu_custom_call.1
$region0: #{tpu_custom_call.1}
  #allocation0 [shape = 'u32[]', space=smem, size = 0x4, offset = 0x4, fixed_abs, tag = 'smem constant byte address 0x4 - core index']
  #allocation1 [shape = 'u32[72,128]{1,0:T(1,128)}', space=vmem, size = 0x9000, scoped, tag = 'internal scratch']
  %s0 = inlined_call_operand.vmem [shape: f32[300,17], index: 0, kind: input, shape index: {}]
  %s1 = inlined_call_operand.vmem [shape: f32[17,32], index: 1, kind: input, shape index: {}]
  %s2 = inlined_call_operand.vmem [shape: f32[1,32], index: 2, kind: input, shape index: {}]
  %s3 = inlined_call_operand.vmem [shape: f32[32,8], index: 3, kind: input, shape index: {}]
  %s4 = inlined_call_operand.vmem [shape: f32[1,8], index: 4, kind: input, shape index: {}]
  %s5 = inlined_call_operand.vmem [shape: f32[300,8], index: 5, kind: output, shape index: {}]
  %s6 = sld [smem:[#allocation0]]
  $region53: #{tpu_custom_call.1} parent=0
    _
  %s8 = ssub.s32 1, %s6
  %s9 = scalar_select 0, %s8, %s6
  loop: start=0, step=1, limit=4
  $region2: #{tpu_custom_call.1} parent=0 // loop_pre_header
    _
  $region3: #{tpu_custom_call.1} parent=0 // loop_header
    %s11 = sphi 0, %s15
    %p12 = scmp.ge.s32.totalorder %s11, 4
    %s21 = sphi 0, %s23
    %s24 = sphi 0, %s21
    %s25 = sphi 0, %s24
    %s41 = sphi 0, %s25
    %s45 = sphi 0, %s45
    %s47 = sphi 0, %s45
    %s48 = sphi 0, %s47
    %s62 = sphi 0, %s48
    %s66 = sphi 0, %s66
    %s68 = sphi 0, %s66
    %s69 = sphi 0, %s68
    %s83 = sphi 0, %s69
    %s87 = sphi 0, %s87
    %s89 = sphi 0, %s87
    %s90 = sphi 0, %s89
    %s104 = sphi 0, %s90
    %s108 = sphi 0, %s108
    %s110 = sphi 0, %s108
    %s111 = sphi 0, %s110
    %s125 = sphi 0, %s111
    %s131 = sphi 0, %s133
    %s134 = sphi 0, %s131
    %s135 = sphi 0, %s134
    %s151 = sphi 0, %s135
  $region4: #{tpu_custom_call.1} parent=0 // loop_header_branch
    %14 = sbr.rel (%p12) target = $region8
  $region5: #{tpu_custom_call.1} parent=0 // loop_body
    %s16 = ssub.s32 %s11, 1
    %s17 = ssub.s32 %s11, 2
    %s18 = sadd.s32 %s11, 1
    %s19 = ssub.s32 %s11, %s18
    %p20 = scmp.eq.s32.totalorder %s19, 0
    %s22 = sadd.s32 %s21, 1
    %s23 = scalar_select %p20, %s21, %s22
    %p26 = pneg %p20
    %p27 = scmp.eq.s32.totalorder %s11, 1
    %p28 = por %p26, %p27
    %p29 = scmp.ne.s32.totalorder %s21, %s24
    %p30 = scmp.eq.s32.totalorder %s11, 0
    %p31 = por %p29, %p30
    %p32 = scmp.ne.s32.totalorder %s21, %s24
    %p33 = scmp.eq.s32.totalorder %s16, 1
    %p34 = por %p32, %p33
    %p35 = scmp.ne.s32.totalorder %s24, %s25
    %p36 = scmp.eq.s32.totalorder %s16, 0
    %p37 = por %p35, %p36
    %p38 = scmp.ne.s32.totalorder %s24, %s25
    %p39 = scmp.eq.s32.totalorder %s17, 1
    %p40 = por %p38, %p39
    %p42 = scmp.ne.s32.totalorder %s25, %s41
    %p43 = scmp.eq.s32.totalorder %s17, 0
    %p44 = por %p42, %p43
    %s46 = sadd.s32 %s45, 1
    %p49 = scmp.eq.s32.totalorder %s11, 1
    %p50 = scmp.ne.s32.totalorder %s45, %s47
    %p51 = scmp.eq.s32.totalorder %s11, 0
    %p52 = por %p50, %p51
    %p53 = scmp.ne.s32.totalorder %s45, %s47
    %p54 = scmp.eq.s32.totalorder %s16, 1
    %p55 = por %p53, %p54
    %p56 = scmp.ne.s32.totalorder %s47, %s48
    %p57 = scmp.eq.s32.totalorder %s16, 0
    %p58 = por %p56, %p57
    %p59 = scmp.ne.s32.totalorder %s47, %s48
    %p60 = scmp.eq.s32.totalorder %s17, 1
    %p61 = por %p59, %p60
    %p63 = scmp.ne.s32.totalorder %s48, %s62
    %p64 = scmp.eq.s32.totalorder %s17, 0
    %p65 = por %p63, %p64
    %s67 = sadd.s32 %s66, 1
    %p70 = scmp.eq.s32.totalorder %s11, 1
    %p71 = scmp.ne.s32.totalorder %s66, %s68
    %p72 = scmp.eq.s32.totalorder %s11, 0
    %p73 = por %p71, %p72
    %p74 = scmp.ne.s32.totalorder %s66, %s68
    %p75 = scmp.eq.s32.totalorder %s16, 1
    %p76 = por %p74, %p75
    %p77 = scmp.ne.s32.totalorder %s68, %s69
    %p78 = scmp.eq.s32.totalorder %s16, 0
    %p79 = por %p77, %p78
    %p80 = scmp.ne.s32.totalorder %s68, %s69
    %p81 = scmp.eq.s32.totalorder %s17, 1
    %p82 = por %p80, %p81
    %p84 = scmp.ne.s32.totalorder %s69, %s83
    %p85 = scmp.eq.s32.totalorder %s17, 0
    %p86 = por %p84, %p85
    %s88 = sadd.s32 %s87, 1
    %p91 = scmp.eq.s32.totalorder %s11, 1
    %p92 = scmp.ne.s32.totalorder %s87, %s89
    %p93 = scmp.eq.s32.totalorder %s11, 0
    %p94 = por %p92, %p93
    %p95 = scmp.ne.s32.totalorder %s87, %s89
    %p96 = scmp.eq.s32.totalorder %s16, 1
    %p97 = por %p95, %p96
    %p98 = scmp.ne.s32.totalorder %s89, %s90
    %p99 = scmp.eq.s32.totalorder %s16, 0
    %p100 = por %p98, %p99
    %p101 = scmp.ne.s32.totalorder %s89, %s90
    %p102 = scmp.eq.s32.totalorder %s17, 1
    %p103 = por %p101, %p102
    %p105 = scmp.ne.s32.totalorder %s90, %s104
    %p106 = scmp.eq.s32.totalorder %s17, 0
    %p107 = por %p105, %p106
    %s109 = sadd.s32 %s108, 1
    %p112 = scmp.eq.s32.totalorder %s11, 1
    %p113 = scmp.ne.s32.totalorder %s108, %s110
    %p114 = scmp.eq.s32.totalorder %s11, 0
    %p115 = por %p113, %p114
    %p116 = scmp.ne.s32.totalorder %s108, %s110
    %p117 = scmp.eq.s32.totalorder %s16, 1
    %p118 = por %p116, %p117
    %p119 = scmp.ne.s32.totalorder %s110, %s111
    %p120 = scmp.eq.s32.totalorder %s16, 0
    %p121 = por %p119, %p120
    %p122 = scmp.ne.s32.totalorder %s110, %s111
    %p123 = scmp.eq.s32.totalorder %s17, 1
    %p124 = por %p122, %p123
    %p126 = scmp.ne.s32.totalorder %s111, %s125
    %p127 = scmp.eq.s32.totalorder %s17, 0
    %p128 = por %p126, %p127
    %s129 = ssub.s32 %s11, %s18
    %p130 = scmp.eq.s32.totalorder %s129, 0
    %s132 = sadd.s32 %s131, 1
    %s133 = scalar_select %p130, %s131, %s132
    %p136 = pneg %p130
    %p137 = scmp.eq.s32.totalorder %s11, 1
    %p138 = por %p136, %p137
    %p139 = scmp.ne.s32.totalorder %s131, %s134
    %p140 = scmp.eq.s32.totalorder %s11, 0
    %p141 = por %p139, %p140
    %p142 = scmp.ne.s32.totalorder %s131, %s134
    %p143 = scmp.eq.s32.totalorder %s16, 1
    %p144 = por %p142, %p143
    %p145 = scmp.ne.s32.totalorder %s134, %s135
    %p146 = scmp.eq.s32.totalorder %s16, 0
    %p147 = por %p145, %p146
    %p148 = scmp.ne.s32.totalorder %s134, %s135
    %p149 = scmp.eq.s32.totalorder %s17, 1
    %p150 = por %p148, %p149
    %p152 = scmp.ne.s32.totalorder %s135, %s151
    %p153 = scmp.eq.s32.totalorder %s17, 0
    %p154 = por %p152, %p153
    %p155 = scmp.le.s32.totalorder 1, %s11
    %p156 = scmp.lt.s32.totalorder %s11, 3
    %p157 = pnand %p155, %p156
    %p158 = pneg %p157
    // Predicated region
    $region9: #{tpu_custom_call.1} parent=5 // pred_check
      _
    $region10: #{tpu_custom_call.1} parent=5 // pred_check_branch
      %160 = sbr.rel (%p157) target = $region12
    $region11: #{tpu_custom_call.1} parent=5 // pred_region
      %s161 = ssub.s32 %s11, 1
      // Predicated region
      $region13: #{tpu_custom_call.1} parent=11 // pred_check
        %p162 = pneg %p58
      $region14: #{tpu_custom_call.1} parent=11 // pred_check_branch
        %164 = sbr.rel (%p162) target = $region16
      $region15: #{tpu_custom_call.1} parent=11 // pred_region
        _
      $region16: #{tpu_custom_call.1} parent=11 // pred_fallthru
        _
      // Predicated region
      $region17: #{tpu_custom_call.1} parent=11 // pred_check
        %p165 = pneg %p79
      $region18: #{tpu_custom_call.1} parent=11 // pred_check_branch
        %167 = sbr.rel (%p165) target = $region20
      $region19: #{tpu_custom_call.1} parent=11 // pred_region
        _
      $region20: #{tpu_custom_call.1} parent=11 // pred_fallthru
        _
      // Predicated region
      $region21: #{tpu_custom_call.1} parent=11 // pred_check
        %p168 = pneg %p100
      $region22: #{tpu_custom_call.1} parent=11 // pred_check_branch
        %170 = sbr.rel (%p168) target = $region24
      $region23: #{tpu_custom_call.1} parent=11 // pred_region
        _
      $region24: #{tpu_custom_call.1} parent=11 // pred_fallthru
        _
      // Predicated region
      $region25: #{tpu_custom_call.1} parent=11 // pred_check
        %p171 = pneg %p121
      $region26: #{tpu_custom_call.1} parent=11 // pred_check_branch
        %173 = sbr.rel (%p171) target = $region28
      $region27: #{tpu_custom_call.1} parent=11 // pred_region
        _
      $region28: #{tpu_custom_call.1} parent=11 // pred_fallthru
        _
    $region12: #{tpu_custom_call.1} parent=5 // pred_fallthru
      _
    %p174 = scmp.lt.s32.totalorder %s11, 2
    // Predicated region
    $region29: #{tpu_custom_call.1} parent=5 // pred_check
      %p175 = pneg %p174
    $region30: #{tpu_custom_call.1} parent=5 // pred_check_branch
      %177 = sbr.rel (%p175) target = $region32
    $region31: #{tpu_custom_call.1} parent=5 // pred_region
      // Predicated region
      $region33: #{tpu_custom_call.1} parent=31 // pred_check
        %p178 = pneg %p31
      $region34: #{tpu_custom_call.1} parent=31 // pred_check_branch
        %180 = sbr.rel (%p178) target = $region36
      $region35: #{tpu_custom_call.1} parent=31 // pred_region
        %s181 = smul.u32 19, %s11
        %p182 = scmp.lt.s32.totalorder %s181, 37
        %s183 = scalar_select %p182, %s181, 37
        %s184 = smul.addr %s183, 8
        %s185 = scalar_lea.vmem %s0, %s184
        %s186 = smul.u32 19, %s11
      $region36: #{tpu_custom_call.1} parent=31 // pred_fallthru
        _
    $region32: #{tpu_custom_call.1} parent=5 // pred_fallthru
      _
    %p187 = scmp.le.s32.totalorder 1, %s11
    %p188 = scmp.lt.s32.totalorder %s11, 3
    %p189 = pnand %p187, %p188
    %p190 = pneg %p189
    // Predicated region
    $region37: #{tpu_custom_call.1} parent=5 // pred_check
      _
    $region38: #{tpu_custom_call.1} parent=5 // pred_check_branch
      %192 = sbr.rel (%p189) target = $region40
    $region39: #{tpu_custom_call.1} parent=5 // pred_region
      %s193 = ssub.s32 %s11, 1
      %s194 = smul.u32 19, %s16
      %p195 = scmp.lt.s32.totalorder %s194, 37
      %s196 = scalar_select %p195, %s194, 37
      %s197 = smul.addr %s196, 8
      %s198 = scalar_lea.vmem %s0, %s197
      %p199 = pneg %p37
      %p200 = pneg %p34
      %p201 = pneg %p58
      %p202 = pneg %p55
      %p203 = pneg %p79
      %p204 = pneg %p76
      %p205 = pneg %p100
      %p206 = pneg %p97
      %p207 = pneg %p121
      %p208 = pneg %p118
      %p209 = pneg %p147
      %p210 = pneg %p144
      %s211 = smul.u32 19, %s16
      %p212 = scmp.lt.s32.totalorder %s211, 37
      %s213 = scalar_select %p212, %s211, 37
      %s214 = smul.addr %s213, 8
      %s215 = scalar_lea.vmem %s5, %s214
      %s216 = smul.u32 19, %s16
      %p217 = scmp.lt.s32.totalorder %s216, 37
      %s218 = scalar_select %p217, %s216, 37
      %s219 = smul.addr %s218, 8
      %s220 = scalar_lea.vmem %s0, %s219
      %s221 = smul.u32 19, %s16
      %s222 = smul.u32 19, %s16
      %p223 = scmp.lt.s32.totalorder %s222, 37
      %s224 = scalar_select %p223, %s222, 37
      %s225 = smul.addr %s224, 8
      %s226 = scalar_lea.vmem %s5, %s225
      %s227 = smul.u32 19, %s16
      %v228 = vld [vmem:[%s220] sm:$0xff]
      %v229 = vld [vmem:[%s220 + $0x8] sm:$0xff]
      %v230 = vld [vmem:[%s220 + $0x10] sm:$0xff]
      %v231 = vld [vmem:[%s220 + $0x18] sm:$0xff]
      %v232 = vld [vmem:[%s220 + $0x20] sm:$0xff]
      %v233 = vld [vmem:[%s220 + $0x28] sm:$0xff]
      %v234 = vld [vmem:[%s220 + $0x30] sm:$0xff]
      %v235 = vld [vmem:[%s220 + $0x38] sm:$0xff]
      %v236 = vld [vmem:[%s220 + $0x40] sm:$0xff]
      %v237 = vld [vmem:[%s220 + $0x48] sm:$0xff]
      %v238 = vld [vmem:[%s220 + $0x50] sm:$0xff]
      %v239 = vld [vmem:[%s220 + $0x58] sm:$0xff]
      %v240 = vld [vmem:[%s220 + $0x60] sm:$0xff]
      %v241 = vld [vmem:[%s220 + $0x68] sm:$0xff]
      %v242 = vld [vmem:[%s220 + $0x70] sm:$0xff]
      %v243 = vld [vmem:[%s220 + $0x78] sm:$0xff]
      %v244 = vld [vmem:[%s220 + $0x80] sm:$0xff]
      %v245 = vld [vmem:[%s220 + $0x88] sm:$0xff]
      %v246 = vld [vmem:[%s220 + $0x90] sm:$0xff]
      %v247 = vld [vmem:[%s1] sm:$0xff]
      %v248 = vld [vmem:[%s1 + $0x8] sm:$0xff]
      %v249 = vld [vmem:[%s1 + $0x10] sm:$0x1]
      %v250 = vld [vmem:[%s2] sm:$0x1]
      %v252 = vperm.slane %v250, 0
      %vm254 = vcmask 138240
      %v256 = vsel %vm254, %v228, 0
      %v259 = vsel %vm254, %v229, 0
      %v262 = vsel %vm254, %v230, 0
      %v265 = vsel %vm254, %v231, 0
      %v268 = vsel %vm254, %v232, 0
      %v271 = vsel %vm254, %v233, 0
      %v274 = vsel %vm254, %v234, 0
      %v277 = vsel %vm254, %v235, 0
      %v280 = vsel %vm254, %v236, 0
      %v283 = vsel %vm254, %v237, 0
      %v286 = vsel %vm254, %v238, 0
      %v289 = vsel %vm254, %v239, 0
      %v292 = vsel %vm254, %v240, 0
      %v295 = vsel %vm254, %v241, 0
      %v298 = vsel %vm254, %v242, 0
      %v301 = vsel %vm254, %v243, 0
      %v304 = vsel %vm254, %v244, 0
      %v307 = vsel %vm254, %v245, 0
      %v310 = vsel %vm254, %v246, 0
      %vm312 = vcmask 1040384
      %v314 = vsel %vm312, %v249, 0
      %316 = vmatpush.msra.mxu0 0.0
      %317 = vmatpush.msra.mxu0 0.0
      %318 = vmatpush.msra.mxu0 0.0
      %319 = vmatpush.msra.mxu0 0.0
      %320 = vmatpush.msra.mxu0 0.0
      %321 = vmatpush.msra.mxu0 0.0
      %322 = vmatpush.msra.mxu0 0.0
      %323 = vmatpush.msra.mxu0 0.0
      %324 = vmatpush.msra.mxu0 0.0
      %325 = vmatpush.msra.mxu0 0.0
      %326 = vmatpush.msra.mxu0 0.0
      %327 = vmatpush.msra.mxu0 0.0
      %328 = vmatpush.msra.mxu0 0.0
      %329 = vmatpush.msra.mxu0 %v314
      %330 = vmatpush.msra.mxu0 %v248
      %331 = vmatpush.msra.mxu0 %v247
      %332 = vmatmul.f32.gmra.mxu0 %v256
      %v333 = vpop.f32.mrf.mxu0
      %v334 = vadd.f32 %v252, %v333
      %335 = vmatmul.f32.gmra.mxu0 %v259
      %v336 = vpop.f32.mrf.mxu0
      %v337 = vadd.f32 %v252, %v336
      %338 = vmatmul.f32.gmra.mxu0 %v262
      %v339 = vpop.f32.mrf.mxu0
      %v340 = vadd.f32 %v252, %v339
      %341 = vmatmul.f32.gmra.mxu0 %v265
      %v342 = vpop.f32.mrf.mxu0
      %v343 = vadd.f32 %v252, %v342
      %344 = vmatmul.f32.gmra.mxu0 %v268
      %v345 = vpop.f32.mrf.mxu0
      %v346 = vadd.f32 %v252, %v345
      %347 = vmatmul.f32.gmra.mxu0 %v271
      %v348 = vpop.f32.mrf.mxu0
      %v349 = vadd.f32 %v252, %v348
      %350 = vmatmul.f32.gmra.mxu0 %v274
      %v351 = vpop.f32.mrf.mxu0
      %v352 = vadd.f32 %v252, %v351
      %353 = vmatmul.f32.gmra.mxu0 %v277
      %v354 = vpop.f32.mrf.mxu0
      %v355 = vadd.f32 %v252, %v354
      %356 = vmatmul.f32.gmra.mxu0 %v280
      %v357 = vpop.f32.mrf.mxu0
      %v358 = vadd.f32 %v252, %v357
      %359 = vmatmul.f32.gmra.mxu0 %v283
      %v360 = vpop.f32.mrf.mxu0
      %v361 = vadd.f32 %v252, %v360
      %362 = vmatmul.f32.gmra.mxu0 %v286
      %v363 = vpop.f32.mrf.mxu0
      %v364 = vadd.f32 %v252, %v363
      %365 = vmatmul.f32.gmra.mxu0 %v289
      %v366 = vpop.f32.mrf.mxu0
      %v367 = vadd.f32 %v252, %v366
      %368 = vmatmul.f32.gmra.mxu0 %v292
      %v369 = vpop.f32.mrf.mxu0
      %v370 = vadd.f32 %v252, %v369
      %371 = vmatmul.f32.gmra.mxu0 %v295
      %v372 = vpop.f32.mrf.mxu0
      %v373 = vadd.f32 %v252, %v372
      %374 = vmatmul.f32.gmra.mxu0 %v298
      %v375 = vpop.f32.mrf.mxu0
      %v376 = vadd.f32 %v252, %v375
      %377 = vmatmul.f32.gmra.mxu0 %v301
      %v378 = vpop.f32.mrf.mxu0
      %v379 = vadd.f32 %v252, %v378
      %380 = vmatmul.f32.gmra.mxu0 %v304
      %v381 = vpop.f32.mrf.mxu0
      %v382 = vadd.f32 %v252, %v381
      %383 = vmatmul.f32.gmra.mxu0 %v307
      %v384 = vpop.f32.mrf.mxu0
      %v385 = vadd.f32 %v252, %v384
      %386 = vmatmul.f32.gmra.mxu0 %v310
      %v387 = vpop.f32.mrf.mxu0
      %v388 = vadd.f32 %v252, %v387
      %389 = vdwg.mxu0
      %v390 = vmax.f32 %v334, 0.0
      %v391 = vmax.f32 %v337, 0.0
      %v392 = vmax.f32 %v340, 0.0
      %v393 = vmax.f32 %v343, 0.0
      %v394 = vmax.f32 %v346, 0.0
      %v395 = vmax.f32 %v349, 0.0
      %v396 = vmax.f32 %v352, 0.0
      %v397 = vmax.f32 %v355, 0.0
      %v398 = vmax.f32 %v358, 0.0
      %v399 = vmax.f32 %v361, 0.0
      %v400 = vmax.f32 %v364, 0.0
      %v401 = vmax.f32 %v367, 0.0
      %v402 = vmax.f32 %v370, 0.0
      %v403 = vmax.f32 %v373, 0.0
      %v404 = vmax.f32 %v376, 0.0
      %v405 = vmax.f32 %v379, 0.0
      %v406 = vmax.f32 %v382, 0.0
      %v407 = vmax.f32 %v385, 0.0
      %v408 = vmax.f32 %v388, 0.0
      %v409 = vld [vmem:[%s3] sm:$0xff]
      %v410 = vld [vmem:[%s3 + $0x8] sm:$0xff]
      %v411 = vld [vmem:[%s3 + $0x10] sm:$0xff]
      %v412 = vld [vmem:[%s3 + $0x18] sm:$0xff]
      %v413 = vld [vmem:[%s4] sm:$0x1]
      %v415 = vperm.slane %v413, 0
      %vm417 = vcmask 261120
      %v419 = vsel %vm417, %v390, 0
      %v422 = vsel %vm417, %v391, 0
      %v425 = vsel %vm417, %v392, 0
      %v428 = vsel %vm417, %v393, 0
      %v431 = vsel %vm417, %v394, 0
      %v434 = vsel %vm417, %v395, 0
      %v437 = vsel %vm417, %v396, 0
      %v440 = vsel %vm417, %v397, 0
      %v443 = vsel %vm417, %v398, 0
      %v446 = vsel %vm417, %v399, 0
      %v449 = vsel %vm417, %v400, 0
      %v452 = vsel %vm417, %v401, 0
      %v455 = vsel %vm417, %v402, 0
      %v458 = vsel %vm417, %v403, 0
      %v461 = vsel %vm417, %v404, 0
      %v464 = vsel %vm417, %v405, 0
      %v467 = vsel %vm417, %v406, 0
      %v470 = vsel %vm417, %v407, 0
      %v473 = vsel %vm417, %v408, 0
      %475 = vmatpush.msra.mxu0 0.0
      %476 = vmatpush.msra.mxu0 0.0
      %477 = vmatpush.msra.mxu0 0.0
      %478 = vmatpush.msra.mxu0 0.0
      %479 = vmatpush.msra.mxu0 0.0
      %480 = vmatpush.msra.mxu0 0.0
      %481 = vmatpush.msra.mxu0 0.0
      %482 = vmatpush.msra.mxu0 0.0
      %483 = vmatpush.msra.mxu0 0.0
      %484 = vmatpush.msra.mxu0 0.0
      %485 = vmatpush.msra.mxu0 0.0
      %486 = vmatpush.msra.mxu0 0.0
      %487 = vmatpush.msra.mxu0 %v412
      %488 = vmatpush.msra.mxu0 %v411
      %489 = vmatpush.msra.mxu0 %v410
      %490 = vmatpush.msra.mxu0 %v409
      %491 = vmatmul.f32.gmra.mxu0 %v419
      %v492 = vpop.f32.mrf.mxu0
      %v493 = vadd.f32 %v415, %v492
      %494 = vmatmul.f32.gmra.mxu0 %v422
      %v495 = vpop.f32.mrf.mxu0
      %v496 = vadd.f32 %v415, %v495
      %497 = vmatmul.f32.gmra.mxu0 %v425
      %v498 = vpop.f32.mrf.mxu0
      %v499 = vadd.f32 %v415, %v498
      %500 = vmatmul.f32.gmra.mxu0 %v428
      %v501 = vpop.f32.mrf.mxu0
      %v502 = vadd.f32 %v415, %v501
      %503 = vmatmul.f32.gmra.mxu0 %v431
      %v504 = vpop.f32.mrf.mxu0
      %v505 = vadd.f32 %v415, %v504
      %506 = vmatmul.f32.gmra.mxu0 %v434
      %v507 = vpop.f32.mrf.mxu0
      %v508 = vadd.f32 %v415, %v507
      %509 = vmatmul.f32.gmra.mxu0 %v437
      %v510 = vpop.f32.mrf.mxu0
      %v511 = vadd.f32 %v415, %v510
      %512 = vmatmul.f32.gmra.mxu0 %v440
      %v513 = vpop.f32.mrf.mxu0
      %v514 = vadd.f32 %v415, %v513
      %515 = vmatmul.f32.gmra.mxu0 %v443
      %v516 = vpop.f32.mrf.mxu0
      %v517 = vadd.f32 %v415, %v516
      %518 = vmatmul.f32.gmra.mxu0 %v446
      %v519 = vpop.f32.mrf.mxu0
      %v520 = vadd.f32 %v415, %v519
      %521 = vmatmul.f32.gmra.mxu0 %v449
      %v522 = vpop.f32.mrf.mxu0
      %v523 = vadd.f32 %v415, %v522
      %524 = vmatmul.f32.gmra.mxu0 %v452
      %v525 = vpop.f32.mrf.mxu0
      %v526 = vadd.f32 %v415, %v525
      %527 = vmatmul.f32.gmra.mxu0 %v455
      %v528 = vpop.f32.mrf.mxu0
      %v529 = vadd.f32 %v415, %v528
      %530 = vmatmul.f32.gmra.mxu0 %v458
      %v531 = vpop.f32.mrf.mxu0
      %v532 = vadd.f32 %v415, %v531
      %533 = vmatmul.f32.gmra.mxu0 %v461
      %v534 = vpop.f32.mrf.mxu0
      %v535 = vadd.f32 %v415, %v534
      %536 = vmatmul.f32.gmra.mxu0 %v464
      %v537 = vpop.f32.mrf.mxu0
      %v538 = vadd.f32 %v415, %v537
      %539 = vmatmul.f32.gmra.mxu0 %v467
      %v540 = vpop.f32.mrf.mxu0
      %v541 = vadd.f32 %v415, %v540
      %542 = vmatmul.f32.gmra.mxu0 %v470
      %v543 = vpop.f32.mrf.mxu0
      %v544 = vadd.f32 %v415, %v543
      %545 = vmatmul.f32.gmra.mxu0 %v473
      %v546 = vpop.f32.mrf.mxu0
      %v547 = vadd.f32 %v415, %v546
      %548 = vdwg.mxu0
      %v549 = vmax.f32 %v493, 0.0
      %v550 = vmax.f32 %v496, 0.0
      %v551 = vmax.f32 %v499, 0.0
      %v552 = vmax.f32 %v502, 0.0
      %v553 = vmax.f32 %v505, 0.0
      %v554 = vmax.f32 %v508, 0.0
      %v555 = vmax.f32 %v511, 0.0
      %v556 = vmax.f32 %v514, 0.0
      %v557 = vmax.f32 %v517, 0.0
      %v558 = vmax.f32 %v520, 0.0
      %v559 = vmax.f32 %v523, 0.0
      %v560 = vmax.f32 %v526, 0.0
      %v561 = vmax.f32 %v529, 0.0
      %v562 = vmax.f32 %v532, 0.0
      %v563 = vmax.f32 %v535, 0.0
      %v564 = vmax.f32 %v538, 0.0
      %v565 = vmax.f32 %v541, 0.0
      %v566 = vmax.f32 %v544, 0.0
      %v567 = vmax.f32 %v547, 0.0
      %v568 = vlaneseq
      %v569 = vand.u32 %v568, 127
      %vm570 = vcmp.lt.s32.totalorder %v569, 7
      %v571 = vsel %vm570, %v549, -3.4028235e+38
      %v572 = vsel %vm570, %v550, -3.4028235e+38
      %v573 = vsel %vm570, %v551, -3.4028235e+38
      %v574 = vsel %vm570, %v552, -3.4028235e+38
      %v575 = vsel %vm570, %v553, -3.4028235e+38
      %v576 = vsel %vm570, %v554, -3.4028235e+38
      %v577 = vsel %vm570, %v555, -3.4028235e+38
      %v578 = vsel %vm570, %v556, -3.4028235e+38
      %v579 = vsel %vm570, %v557, -3.4028235e+38
      %v580 = vsel %vm570, %v558, -3.4028235e+38
      %v581 = vsel %vm570, %v559, -3.4028235e+38
      %v582 = vsel %vm570, %v560, -3.4028235e+38
      %v583 = vsel %vm570, %v561, -3.4028235e+38
      %v584 = vsel %vm570, %v562, -3.4028235e+38
      %v585 = vsel %vm570, %v563, -3.4028235e+38
      %v586 = vsel %vm570, %v564, -3.4028235e+38
      %v587 = vsel %vm570, %v565, -3.4028235e+38
      %v588 = vsel %vm570, %v566, -3.4028235e+38
      %v589 = vsel %vm570, %v567, -3.4028235e+38
      %vm590 = vcmask 64512
      %v591 = vsel %vm590, %v571, -inf
      %592 = vmax.xlane.f32.xlu0 %v591
      %v593 = vpop.xlane.xlu0 %592
      %v594 = vsel %vm590, %v572, -inf
      %595 = vmax.xlane.f32.xlu0 %v594
      %v596 = vpop.xlane.xlu0 %595
      %v597 = vsel %vm590, %v573, -inf
      %598 = vmax.xlane.f32.xlu0 %v597
      %v599 = vpop.xlane.xlu0 %598
      %v600 = vsel %vm590, %v574, -inf
      %601 = vmax.xlane.f32.xlu0 %v600
      %v602 = vpop.xlane.xlu0 %601
      %v603 = vsel %vm590, %v575, -inf
      %604 = vmax.xlane.f32.xlu0 %v603
      %v605 = vpop.xlane.xlu0 %604
      %v606 = vsel %vm590, %v576, -inf
      %607 = vmax.xlane.f32.xlu0 %v606
      %v608 = vpop.xlane.xlu0 %607
      %v609 = vsel %vm590, %v577, -inf
      %610 = vmax.xlane.f32.xlu0 %v609
      %v611 = vpop.xlane.xlu0 %610
      %v612 = vsel %vm590, %v578, -inf
      %613 = vmax.xlane.f32.xlu0 %v612
      %v614 = vpop.xlane.xlu0 %613
      %v615 = vsel %vm590, %v579, -inf
      %616 = vmax.xlane.f32.xlu0 %v615
      %v617 = vpop.xlane.xlu0 %616
      %v618 = vsel %vm590, %v580, -inf
      %619 = vmax.xlane.f32.xlu0 %v618
      %v620 = vpop.xlane.xlu0 %619
      %v621 = vsel %vm590, %v581, -inf
      %622 = vmax.xlane.f32.xlu0 %v621
      %v623 = vpop.xlane.xlu0 %622
      %v624 = vsel %vm590, %v582, -inf
      %625 = vmax.xlane.f32.xlu0 %v624
      %v626 = vpop.xlane.xlu0 %625
      %v627 = vsel %vm590, %v583, -inf
      %628 = vmax.xlane.f32.xlu0 %v627
      %v629 = vpop.xlane.xlu0 %628
      %v630 = vsel %vm590, %v584, -inf
      %631 = vmax.xlane.f32.xlu0 %v630
      %v632 = vpop.xlane.xlu0 %631
      %v633 = vsel %vm590, %v585, -inf
      %634 = vmax.xlane.f32.xlu0 %v633
      %v635 = vpop.xlane.xlu0 %634
      %v636 = vsel %vm590, %v586, -inf
      %637 = vmax.xlane.f32.xlu0 %v636
      %v638 = vpop.xlane.xlu0 %637
      %v639 = vsel %vm590, %v587, -inf
      %640 = vmax.xlane.f32.xlu0 %v639
      %v641 = vpop.xlane.xlu0 %640
      %v642 = vsel %vm590, %v588, -inf
      %643 = vmax.xlane.f32.xlu0 %v642
      %v644 = vpop.xlane.xlu0 %643
      %v645 = vsel %vm590, %v589, -inf
      %646 = vmax.xlane.f32.xlu0 %v645
      %v647 = vpop.xlane.xlu0 %646
      %v648 = vsub.f32 %v571, %v593
      %v649 = vsub.f32 %v572, %v596
      %v650 = vsub.f32 %v573, %v599
      %v651 = vsub.f32 %v574, %v602
      %v652 = vsub.f32 %v575, %v605
      %v653 = vsub.f32 %v576, %v608
      %v654 = vsub.f32 %v577, %v611
      %v655 = vsub.f32 %v578, %v614
      %v656 = vsub.f32 %v579, %v617
      %v657 = vsub.f32 %v580, %v620
      %v658 = vsub.f32 %v581, %v623
      %v659 = vsub.f32 %v582, %v626
      %v660 = vsub.f32 %v583, %v629
      %v661 = vsub.f32 %v584, %v632
      %v662 = vsub.f32 %v585, %v635
      %v663 = vsub.f32 %v586, %v638
      %v664 = vsub.f32 %v587, %v641
      %v665 = vsub.f32 %v588, %v644
      %v666 = vsub.f32 %v589, %v647
      %v667 = vmul.f32 %v648, 1.442695
      %v668 = vpow.pop %v667
      %v669 = vmul.f32 %v649, 1.442695
      %v670 = vpow.pop %v669
      %v671 = vmul.f32 %v650, 1.442695
      %v672 = vpow.pop %v671
      %v673 = vmul.f32 %v651, 1.442695
      %v674 = vpow.pop %v673
      %v675 = vmul.f32 %v652, 1.442695
      %v676 = vpow.pop %v675
      %v677 = vmul.f32 %v653, 1.442695
      %v678 = vpow.pop %v677
      %v679 = vmul.f32 %v654, 1.442695
      %v680 = vpow.pop %v679
      %v681 = vmul.f32 %v655, 1.442695
      %v682 = vpow.pop %v681
      %v683 = vmul.f32 %v656, 1.442695
      %v684 = vpow.pop %v683
      %v685 = vmul.f32 %v657, 1.442695
      %v686 = vpow.pop %v685
      %v687 = vmul.f32 %v658, 1.442695
      %v688 = vpow.pop %v687
      %v689 = vmul.f32 %v659, 1.442695
      %v690 = vpow.pop %v689
      %v691 = vmul.f32 %v660, 1.442695
      %v692 = vpow.pop %v691
      %v693 = vmul.f32 %v661, 1.442695
      %v694 = vpow.pop %v693
      %v695 = vmul.f32 %v662, 1.442695
      %v696 = vpow.pop %v695
      %v697 = vmul.f32 %v663, 1.442695
      %v698 = vpow.pop %v697
      %v699 = vmul.f32 %v664, 1.442695
      %v700 = vpow.pop %v699
      %v701 = vmul.f32 %v665, 1.442695
      %v702 = vpow.pop %v701
      %v703 = vmul.f32 %v666, 1.442695
      %v704 = vpow.pop %v703
      %v705 = vsel %vm570, %v668, 0.0
      %v706 = vsel %vm570, %v670, 0.0
      %v707 = vsel %vm570, %v672, 0.0
      %v708 = vsel %vm570, %v674, 0.0
      %v709 = vsel %vm570, %v676, 0.0
      %v710 = vsel %vm570, %v678, 0.0
      %v711 = vsel %vm570, %v680, 0.0
      %v712 = vsel %vm570, %v682, 0.0
      %v713 = vsel %vm570, %v684, 0.0
      %v714 = vsel %vm570, %v686, 0.0
      %v715 = vsel %vm570, %v688, 0.0
      %v716 = vsel %vm570, %v690, 0.0
      %v717 = vsel %vm570, %v692, 0.0
      %v718 = vsel %vm570, %v694, 0.0
      %v719 = vsel %vm570, %v696, 0.0
      %v720 = vsel %vm570, %v698, 0.0
      %v721 = vsel %vm570, %v700, 0.0
      %v722 = vsel %vm570, %v702, 0.0
      %v723 = vsel %vm570, %v704, 0.0
      %v724 = vsel %vm590, %v705, 0.0
      %725 = vadd.xlane.f32.xlu0 %v724
      %v726 = vpop.xlane.xlu0 %725
      %v727 = vsel %vm590, %v706, 0.0
      %728 = vadd.xlane.f32.xlu0 %v727
      %v729 = vpop.xlane.xlu0 %728
      %v730 = vsel %vm590, %v707, 0.0
      %731 = vadd.xlane.f32.xlu0 %v730
      %v732 = vpop.xlane.xlu0 %731
      %v733 = vsel %vm590, %v708, 0.0
      %734 = vadd.xlane.f32.xlu0 %v733
      %v735 = vpop.xlane.xlu0 %734
      %v736 = vsel %vm590, %v709, 0.0
      %737 = vadd.xlane.f32.xlu0 %v736
      %v738 = vpop.xlane.xlu0 %737
      %v739 = vsel %vm590, %v710, 0.0
      %740 = vadd.xlane.f32.xlu0 %v739
      %v741 = vpop.xlane.xlu0 %740
      %v742 = vsel %vm590, %v711, 0.0
      %743 = vadd.xlane.f32.xlu0 %v742
      %v744 = vpop.xlane.xlu0 %743
      %v745 = vsel %vm590, %v712, 0.0
      %746 = vadd.xlane.f32.xlu0 %v745
      %v747 = vpop.xlane.xlu0 %746
      %v748 = vsel %vm590, %v713, 0.0
      %749 = vadd.xlane.f32.xlu0 %v748
      %v750 = vpop.xlane.xlu0 %749
      %v751 = vsel %vm590, %v714, 0.0
      %752 = vadd.xlane.f32.xlu0 %v751
      %v753 = vpop.xlane.xlu0 %752
      %v754 = vsel %vm590, %v715, 0.0
      %755 = vadd.xlane.f32.xlu0 %v754
      %v756 = vpop.xlane.xlu0 %755
      %v757 = vsel %vm590, %v716, 0.0
      %758 = vadd.xlane.f32.xlu0 %v757
      %v759 = vpop.xlane.xlu0 %758
      %v760 = vsel %vm590, %v717, 0.0
      %761 = vadd.xlane.f32.xlu0 %v760
      %v762 = vpop.xlane.xlu0 %761
      %v763 = vsel %vm590, %v718, 0.0
      %764 = vadd.xlane.f32.xlu0 %v763
      %v765 = vpop.xlane.xlu0 %764
      %v766 = vsel %vm590, %v719, 0.0
      %767 = vadd.xlane.f32.xlu0 %v766
      %v768 = vpop.xlane.xlu0 %767
      %v769 = vsel %vm590, %v720, 0.0
      %770 = vadd.xlane.f32.xlu0 %v769
      %v771 = vpop.xlane.xlu0 %770
      %v772 = vsel %vm590, %v721, 0.0
      %773 = vadd.xlane.f32.xlu0 %v772
      %v774 = vpop.xlane.xlu0 %773
      %v775 = vsel %vm590, %v722, 0.0
      %776 = vadd.xlane.f32.xlu0 %v775
      %v777 = vpop.xlane.xlu0 %776
      %v778 = vsel %vm590, %v723, 0.0
      %779 = vadd.xlane.f32.xlu0 %v778
      %v780 = vpop.xlane.xlu0 %779
      %v781 = vlog2.pop %v726
      %v782 = vmul.f32 %v781, 0.6931472
      %v783 = vlog2.pop %v729
      %v784 = vmul.f32 %v783, 0.6931472
      %v785 = vlog2.pop %v732
      %v786 = vmul.f32 %v785, 0.6931472
      %v787 = vlog2.pop %v735
      %v788 = vmul.f32 %v787, 0.6931472
      %v789 = vlog2.pop %v738
      %v790 = vmul.f32 %v789, 0.6931472
      %v791 = vlog2.pop %v741
      %v792 = vmul.f32 %v791, 0.6931472
      %v793 = vlog2.pop %v744
      %v794 = vmul.f32 %v793, 0.6931472
      %v795 = vlog2.pop %v747
      %v796 = vmul.f32 %v795, 0.6931472
      %v797 = vlog2.pop %v750
      %v798 = vmul.f32 %v797, 0.6931472
      %v799 = vlog2.pop %v753
      %v800 = vmul.f32 %v799, 0.6931472
      %v801 = vlog2.pop %v756
      %v802 = vmul.f32 %v801, 0.6931472
      %v803 = vlog2.pop %v759
      %v804 = vmul.f32 %v803, 0.6931472
      %v805 = vlog2.pop %v762
      %v806 = vmul.f32 %v805, 0.6931472
      %v807 = vlog2.pop %v765
      %v808 = vmul.f32 %v807, 0.6931472
      %v809 = vlog2.pop %v768
      %v810 = vmul.f32 %v809, 0.6931472
      %v811 = vlog2.pop %v771
      %v812 = vmul.f32 %v811, 0.6931472
      %v813 = vlog2.pop %v774
      %v814 = vmul.f32 %v813, 0.6931472
      %v815 = vlog2.pop %v777
      %v816 = vmul.f32 %v815, 0.6931472
      %v817 = vlog2.pop %v780
      %v818 = vmul.f32 %v817, 0.6931472
      %v819 = vsub.f32 %v648, %v782
      %v820 = vsub.f32 %v649, %v784
      %v821 = vsub.f32 %v650, %v786
      %v822 = vsub.f32 %v651, %v788
      %v823 = vsub.f32 %v652, %v790
      %v824 = vsub.f32 %v653, %v792
      %v825 = vsub.f32 %v654, %v794
      %v826 = vsub.f32 %v655, %v796
      %v827 = vsub.f32 %v656, %v798
      %v828 = vsub.f32 %v657, %v800
      %v829 = vsub.f32 %v658, %v802
      %v830 = vsub.f32 %v659, %v804
      %v831 = vsub.f32 %v660, %v806
      %v832 = vsub.f32 %v661, %v808
      %v833 = vsub.f32 %v662, %v810
      %v834 = vsub.f32 %v663, %v812
      %v835 = vsub.f32 %v664, %v814
      %v836 = vsub.f32 %v665, %v816
      %v837 = vsub.f32 %v666, %v818
      %v838 = vsel %vm570, %v819, 0.0
      %v839 = vsel %vm570, %v820, 0.0
      %v840 = vsel %vm570, %v821, 0.0
      %v841 = vsel %vm570, %v822, 0.0
      %v842 = vsel %vm570, %v823, 0.0
      %v843 = vsel %vm570, %v824, 0.0
      %v844 = vsel %vm570, %v825, 0.0
      %v845 = vsel %vm570, %v826, 0.0
      %v846 = vsel %vm570, %v827, 0.0
      %v847 = vsel %vm570, %v828, 0.0
      %v848 = vsel %vm570, %v829, 0.0
      %v849 = vsel %vm570, %v830, 0.0
      %v850 = vsel %vm570, %v831, 0.0
      %v851 = vsel %vm570, %v832, 0.0
      %v852 = vsel %vm570, %v833, 0.0
      %v853 = vsel %vm570, %v834, 0.0
      %v854 = vsel %vm570, %v835, 0.0
      %v855 = vsel %vm570, %v836, 0.0
      %v856 = vsel %vm570, %v837, 0.0
      %857 = vst.msk [vmem:[%s226] sm:$0xff] %vm590, %v838
      %858 = vst.msk [vmem:[%s226 + $0x8] sm:$0xff] %vm590, %v839
      %859 = vst.msk [vmem:[%s226 + $0x10] sm:$0xff] %vm590, %v840
      %860 = vst.msk [vmem:[%s226 + $0x18] sm:$0xff] %vm590, %v841
      %861 = vst.msk [vmem:[%s226 + $0x20] sm:$0xff] %vm590, %v842
      %862 = vst.msk [vmem:[%s226 + $0x28] sm:$0xff] %vm590, %v843
      %863 = vst.msk [vmem:[%s226 + $0x30] sm:$0xff] %vm590, %v844
      %864 = vst.msk [vmem:[%s226 + $0x38] sm:$0xff] %vm590, %v845
      %865 = vst.msk [vmem:[%s226 + $0x40] sm:$0xff] %vm590, %v846
      %866 = vst.msk [vmem:[%s226 + $0x48] sm:$0xff] %vm590, %v847
      %867 = vst.msk [vmem:[%s226 + $0x50] sm:$0xff] %vm590, %v848
      %868 = vst.msk [vmem:[%s226 + $0x58] sm:$0xff] %vm590, %v849
      %869 = vst.msk [vmem:[%s226 + $0x60] sm:$0xff] %vm590, %v850
      %870 = vst.msk [vmem:[%s226 + $0x68] sm:$0xff] %vm590, %v851
      %871 = vst.msk [vmem:[%s226 + $0x70] sm:$0xff] %vm590, %v852
      %872 = vst.msk [vmem:[%s226 + $0x78] sm:$0xff] %vm590, %v853
      %873 = vst.msk [vmem:[%s226 + $0x80] sm:$0xff] %vm590, %v854
      %874 = vst.msk [vmem:[%s226 + $0x88] sm:$0xff] %vm590, %v855
      %875 = vst.msk [vmem:[%s226 + $0x90] sm:$0xff] %vm590, %v856
      %s876 = smul.u32 19, %s16
      %p877 = scmp.lt.s32.totalorder %s876, 37
      %s878 = scalar_select %p877, %s876, 37
      %s879 = smul.addr %s878, 8
      %s880 = scalar_lea.vmem %s5, %s879
      // Predicated region
      $region41: #{tpu_custom_call.1} parent=39 // pred_check
        %p881 = pneg %p144
      $region42: #{tpu_custom_call.1} parent=39 // pred_check_branch
        %883 = sbr.rel (%p881) target = $region44
      $region43: #{tpu_custom_call.1} parent=39 // pred_region
        %s884 = smul.u32 19, %s16
      $region44: #{tpu_custom_call.1} parent=39 // pred_fallthru
        _
    $region40: #{tpu_custom_call.1} parent=5 // pred_fallthru
      _
    %p885 = scmp.le.s32.totalorder 2, %s11
    // Predicated region
    $region45: #{tpu_custom_call.1} parent=5 // pred_check
      %p886 = pneg %p885
    $region46: #{tpu_custom_call.1} parent=5 // pred_check_branch
      %888 = sbr.rel (%p886) target = $region48
    $region47: #{tpu_custom_call.1} parent=5 // pred_region
      %s889 = ssub.s32 %s11, 2
      // Predicated region
      $region49: #{tpu_custom_call.1} parent=47 // pred_check
        %p890 = pneg %p150
      $region50: #{tpu_custom_call.1} parent=47 // pred_check_branch
        %892 = sbr.rel (%p890) target = $region52
      $region51: #{tpu_custom_call.1} parent=47 // pred_region
        %s893 = smul.u32 19, %s17
        %p894 = scmp.lt.s32.totalorder %s893, 37
        %s895 = scalar_select %p894, %s893, 37
        %s896 = smul.addr %s895, 8
        %s897 = scalar_lea.vmem %s5, %s896
      $region52: #{tpu_custom_call.1} parent=47 // pred_fallthru
        _
    $region48: #{tpu_custom_call.1} parent=5 // pred_fallthru
      _
  $region6: #{tpu_custom_call.1} parent=0 // loop_footer
    %s15 = sadd.s32 1, %s11
  $region7: #{tpu_custom_call.1} parent=0 // loop_footer_branch
    %10 = sbr.rel target = $region3
  $region8: #{tpu_custom_call.1} parent=0 // loop_exit
    _

</llo_original>
